<compile_context>
chip_gen: v6e
topology: v6e:2x2x1
jax: 0.10.0
libtpu: 0.0.40
codegen_flags: <defaults>
</compile_context>

<pallas_src>
import functools

import jax
import jax.numpy as jnp
from jax.experimental import pallas as pl
from jax.experimental.pallas import tpu as pltpu

# Fixed hyper-parameters implied by Model.__init__
N_SHC = 45            # Reconstruction(8, 45): lmax=8 -> 45 even SH coefficients
N_EXTRA_TRAPPED = 2   # extra-cellular + trapped-water isotropic compartments
N_HEAD = N_EXTRA_TRAPPED + N_SHC          # 47 fused-head rows (et first, then fodf)
N_HEAD_PAD = 48                            # padded to a multiple of 8 sublanes
D_EXTRA = 3.0e-3      # isotropic diffusivity (extra compartment)
D_TRAPPED = 1.0e-4    # isotropic diffusivity (trapped compartment)
LANE = 128
DEFAULT_TILE_N = 1024  # lanes per spatial tile; ~(2G+48)*4*NT*2 bytes of VMEM, << 32 MiB


def _model_kernel(x_ref, w1p_ref, b1_ref, wh_ref, bh_ref, awf_ref, abf_ref,
                  ee_ref, etr_ref, recon_ref, shc_ref):
    """Fused Deconvolution + Reconstruction for one (batch, spatial-tile) grid step.

    Shapes inside the kernel:
      x_ref    : [1, G, NT]       w1p_ref : [FS, G]      b1_ref : [FS, 1]
      wh_ref   : [48, FS]         bh_ref  : [48, 1]
      awf_ref  : [G, FS]          abf_ref : [G, 1]
      ee_ref   : [1, G, 1]        etr_ref : [1, G, 1]    (precomputed exp(-b*D))
      recon_ref: [1, G, NT]       shc_ref : [1, 48, NT]
        shc rows 0:2  -> extra/trapped fractions (post-softplus)
        shc rows 2:47 -> fODF SH coefficients
        shc row  47   -> padding
    """
    x = x_ref[0]                                                         # [G, NT]

    # --- Deconvolution (s2s already folded into w1p) ----------------------
    h = jnp.dot(w1p_ref[...], x, preferred_element_type=jnp.float32) + b1_ref[...]
    h = jnp.maximum(h, 0.0)                                              # [FS, NT]

    # Fused SH heads: one [48, FS] x [FS, NT] matmul.
    head = jnp.dot(wh_ref[...], h, preferred_element_type=jnp.float32) + bh_ref[...]  # [48, NT]
    frac = jax.nn.softplus(head[0:N_EXTRA_TRAPPED, :])                   # [2, NT] non-neg fractions

    # --- Reconstruction (A folded into awf/abf) ---------------------------
    iso = jnp.mean(x, axis=0, keepdims=True)                             # [1, NT]
    sig = jnp.dot(awf_ref[...], h, preferred_element_type=jnp.float32) + abf_ref[...]  # [G, NT]
    sig = sig + frac[0:1, :] * ee_ref[0] + frac[1:2, :] * etr_ref[0]     # iso compartments
    recon_ref[0] = iso * sig

    # Sublane-aligned, lane-dense output slab.
    shc_ref[0] = head
    shc_ref[0, pl.ds(0, N_EXTRA_TRAPPED), :] = frac  # overwrite et rows with softplus'd values


def init_params(filter_start, g, feature_in=1, seed=42):
    """Deterministic parameter init (fan-in scaled normals)."""
    assert feature_in == 1, "feature_in is fixed to 1 by Model.__init__"
    k = jax.random.PRNGKey(seed)
    k1, k2, k3 = jax.random.split(k, 3)
    fs = filter_start
    params = dict(
        w1=jax.random.normal(k1, (fs, g), jnp.float32) / jnp.sqrt(g),
        b1=jnp.zeros((fs, 1), jnp.float32),
        wf=jax.random.normal(k2, (N_SHC, fs), jnp.float32) / jnp.sqrt(fs),
        bf=jnp.zeros((N_SHC, 1), jnp.float32),
        we=jax.random.normal(k3, (N_EXTRA_TRAPPED, fs), jnp.float32) / jnp.sqrt(fs),
        be=jnp.zeros((N_EXTRA_TRAPPED, 1), jnp.float32),
    )
    return params


@functools.partial(jax.jit, static_argnames=("tile_n",))
def model_forward(x, sampling2sampling, table, A, w1, b1, wf, bf, we, be,
                  *, tile_n=DEFAULT_TILE_N):
    B, F, G_in, X, Y, Z = x.shape
    assert F == 1, "feature_in is fixed to 1"
    G = F * G_in
    N = X * Y * Z
    FS = w1.shape[0]
    assert tile_n % LANE == 0

    # ---- static spatial tiling (lane-dense, 128-multiple tiles) ----------
    n_lane = pl.cdiv(N, LANE) * LANE
    nt = min(tile_n, n_lane)
    n_pad = pl.cdiv(N, nt) * nt
    n_tiles = n_pad // nt

    f32 = jnp.float32
    x_flat = x.reshape(B, G, N).astype(f32)
    if n_pad != N:
        x_flat = jnp.pad(x_flat, ((0, 0), (0, 0), (0, n_pad - N)))

    # ---- algebraic folding (plain JAX, done once per call) ---------------
    s2s = sampling2sampling.astype(f32)
    w1p = jnp.dot(w1.astype(f32), s2s)                                    # [FS, G]  = w1 @ s2s
    # Fused head: rows 0:2 = extra/trapped, rows 2:47 = fODF, row 47 = pad.
    w_head = jnp.concatenate([we.astype(f32), wf.astype(f32)], axis=0)    # [47, FS]
    w_head = jnp.pad(w_head, ((0, N_HEAD_PAD - N_HEAD), (0, 0)))          # [48, FS]
    b_head = jnp.concatenate([be.astype(f32), bf.astype(f32)], axis=0)    # [47, 1]
    b_head = jnp.pad(b_head, ((0, N_HEAD_PAD - N_HEAD), (0, 0)))          # [48, 1]
    A32 = A.astype(f32)
    awf = jnp.dot(A32, wf.astype(f32))                                    # [G, FS]  = A @ wf
    abf = jnp.dot(A32, bf.astype(f32))                                    # [G, 1]   = A @ bf

    bvals = table[:, :-1, -1].reshape(B, G, 1).astype(f32)
    exp_extra = jnp.exp(-bvals * D_EXTRA)                                 # [B, G, 1]
    exp_trap = jnp.exp(-bvals * D_TRAPPED)                                # [B, G, 1]

    out_shapes = (
        jax.ShapeDtypeStruct((B, G, n_pad), f32),                         # reconstruction
        jax.ShapeDtypeStruct((B, N_HEAD_PAD, n_pad), f32),                # fused SH slab
    )

    in_specs = [
        pl.BlockSpec((1, G, nt), lambda b, n: (b, 0, n)),                 # x tile
        pl.BlockSpec((FS, G), lambda b, n: (0, 0)),                       # w1p (folded)
        pl.BlockSpec((FS, 1), lambda b, n: (0, 0)),                       # b1
        pl.BlockSpec((N_HEAD_PAD, FS), lambda b, n: (0, 0)),              # fused head weights
        pl.BlockSpec((N_HEAD_PAD, 1), lambda b, n: (0, 0)),               # fused head bias
        pl.BlockSpec((G, FS), lambda b, n: (0, 0)),                       # A @ wf
        pl.BlockSpec((G, 1), lambda b, n: (0, 0)),                        # A @ bf
        pl.BlockSpec((1, G, 1), lambda b, n: (b, 0, 0)),                  # exp(-b*D_extra)
        pl.BlockSpec((1, G, 1), lambda b, n: (b, 0, 0)),                  # exp(-b*D_trapped)
    ]
    out_specs = (
        pl.BlockSpec((1, G, nt), lambda b, n: (b, 0, n)),
        pl.BlockSpec((1, N_HEAD_PAD, nt), lambda b, n: (b, 0, n)),
    )

    recon, shc = pl.pallas_call(
        _model_kernel,
        out_shape=out_shapes,
        grid=(B, n_tiles),
        in_specs=in_specs,
        out_specs=out_specs,
        compiler_params=pltpu.CompilerParams(
            dimension_semantics=("parallel", "parallel"),
            vmem_limit_bytes=32 * 1024 * 1024,
        ),
    )(x_flat, w1p, b1.astype(f32), w_head, b_head, awf, abf, exp_extra, exp_trap)

    # Glue: strip padding, restore torch-style output shapes.
    x_reconstructed = recon[:, :, :N].reshape(B, G, X, Y, Z)
    x_deconvolved_fodf_coff_shc = (
        shc[:, N_EXTRA_TRAPPED:N_HEAD, :N].reshape(B, 1, N_SHC, X, Y, Z))
    x_deconvolved_extra_trapped_shc = (
        shc[:, :N_EXTRA_TRAPPED, :N].reshape(B, N_EXTRA_TRAPPED, 1, X, Y, Z))
    return x_reconstructed, x_deconvolved_fodf_coff_shc, x_deconvolved_extra_trapped_shc


def _reference_forward(x, s2s, table, A, w1, b1, wf, bf, we, be):
    """Pure-JAX reference using the unfused formulation (numerical sanity check)."""
    B, F, G, X, Y, Z = x.shape
    N = X * Y * Z
    xf = x.reshape(B, G, N).astype(jnp.float32)
    bvals = table[:, :-1, -1].reshape(B, G, 1).astype(jnp.float32)
    xp = jnp.einsum('gh,bhn->bgn', s2s, xf)
    h = jnp.maximum(jnp.einsum('fg,bgn->bfn', w1, xp) + b1[None], 0.0)
    fodf = jnp.einsum('cf,bfn->bcn', wf, h) + bf[None]
    frac = jax.nn.softplus(jnp.einsum('ef,bfn->ben', we, h) + be[None])
    iso = jnp.mean(xf, axis=1, keepdims=True)
    sig_aniso = jnp.einsum('gc,bcn->bgn', A, fodf)
    sig_extra = frac[:, 0:1] * jnp.exp(-bvals * D_EXTRA)
    sig_trap = frac[:, 1:2] * jnp.exp(-bvals * D_TRAPPED)
    recon = iso * (sig_aniso + sig_extra + sig_trap)
    return (recon.reshape(B, G, X, Y, Z),
            fodf.reshape(B, 1, N_SHC, X, Y, Z),
            frac.reshape(B, N_EXTRA_TRAPPED, 1, X, Y, Z))


if __name__ == "__main__":
    # Small, deterministic example consistent with the module's forward.
    # X*Y*Z = 640 with tile_n=256 exercises both multi-tile grids and lane padding.
    B, F, G = 2, 1, 16          # batch, feature_in, gradient directions
    X, Y, Z = 4, 10, 16         # spatial patch (N = 640)
    FILTER_START = 8

    key = jax.random.PRNGKey(0)
    kx, ks, kt, kb, ka = jax.random.split(key, 5)

    x = jnp.abs(jax.random.normal(kx, (B, F, G, X, Y, Z), jnp.float32))

    # sampling2sampling: near-identity projection between sampling schemes
    sampling2sampling = (jnp.eye(G, dtype=jnp.float32)
                         + 0.05 * jax.random.normal(ks, (G, G), jnp.float32))

    # table: [B, G+1, 4] — cols 0..2 gradient dirs, col 3 b-values
    dirs = jax.random.normal(kt, (B, G + 1, 3), jnp.float32)
    dirs = dirs / (jnp.linalg.norm(dirs, axis=-1, keepdims=True) + 1e-6)
    bvals = jax.random.uniform(kb, (B, G + 1, 1), jnp.float32, 0.0, 3000.0)
    table = jnp.concatenate([dirs, bvals], axis=-1)

    # A: SH (lmax=8 -> 45 coeffs) design matrix at the G directions (synthetic)
    A = jax.random.normal(ka, (G, N_SHC), jnp.float32) / jnp.sqrt(N_SHC)

    p = init_params(FILTER_START, F * G, feature_in=F)

    outs = model_forward(x, sampling2sampling, table, A,
                         p["w1"], p["b1"], p["wf"], p["bf"], p["we"], p["be"],
                         tile_n=256)
    outs = jax.block_until_ready(outs)

    x_rec, fodf_shc, et_shc = outs
    assert x_rec.shape == (B, G, X, Y, Z)
    assert fodf_shc.shape == (B, 1, N_SHC, X, Y, Z)
    assert et_shc.shape == (B, N_EXTRA_TRAPPED, 1, X, Y, Z)
    assert all(bool(jnp.isfinite(o).all()) for o in outs)

    # Compare against the unfused pure-JAX reference (folding is exact up to f32 reassoc).
    refs = _reference_forward(x, sampling2sampling, table, A,
                              p["w1"], p["b1"], p["wf"], p["bf"], p["we"], p["be"])
    for got, want in zip(outs, refs):
        assert got.shape == want.shape
        assert bool(jnp.allclose(got, want, rtol=1e-2, atol=1e-2)), \
            float(jnp.max(jnp.abs(got - want)))

    print("KERNEL_OK")
</pallas_src>

<mosaic_0001>
module attributes {stable_mosaic.version = 11 : i64} {
  func.func @_model_kernel(%arg0: i32, %arg1: i32, %arg2: memref<1x16x256xf32, #tpu.memory_space<vmem>>, %arg3: memref<8x16xf32, #tpu.memory_space<vmem>>, %arg4: memref<8x1xf32, #tpu.memory_space<vmem>>, %arg5: memref<48x8xf32, #tpu.memory_space<vmem>>, %arg6: memref<48x1xf32, #tpu.memory_space<vmem>>, %arg7: memref<16x8xf32, #tpu.memory_space<vmem>>, %arg8: memref<16x1xf32, #tpu.memory_space<vmem>>, %arg9: memref<1x16x1xf32, #tpu.memory_space<vmem>>, %arg10: memref<1x16x1xf32, #tpu.memory_space<vmem>>, %arg11: memref<1x16x256xf32, #tpu.memory_space<vmem>>, %arg12: memref<1x48x256xf32, #tpu.memory_space<vmem>>) attributes {dimension_semantics = [#tpu.dimension_semantics<parallel>, #tpu.dimension_semantics<parallel>], iteration_bounds = array<i64: 2, 3>, scalar_prefetch = 0 : i64, scratch_operands = 0 : i64, tpu.core_type = #tpu.core_type<tc>, window_params = [{transform_indices = @transform_0, window_bounds = array<i64: 1, 16, 256>}, {pipeline_mode = #tpu.pipeline_mode<synchronous>, transform_indices = @transform_1, window_bounds = array<i64: 8, 16>}, {pipeline_mode = #tpu.pipeline_mode<synchronous>, transform_indices = @transform_2, window_bounds = array<i64: 8, 1>}, {pipeline_mode = #tpu.pipeline_mode<synchronous>, transform_indices = @transform_3, window_bounds = array<i64: 48, 8>}, {pipeline_mode = #tpu.pipeline_mode<synchronous>, transform_indices = @transform_4, window_bounds = array<i64: 48, 1>}, {pipeline_mode = #tpu.pipeline_mode<synchronous>, transform_indices = @transform_5, window_bounds = array<i64: 16, 8>}, {pipeline_mode = #tpu.pipeline_mode<synchronous>, transform_indices = @transform_6, window_bounds = array<i64: 16, 1>}, {transform_indices = @transform_7, window_bounds = array<i64: 1, 16, 1>}, {transform_indices = @transform_8, window_bounds = array<i64: 1, 16, 1>}, {transform_indices = @transform_9, window_bounds = array<i64: 1, 16, 256>}, {transform_indices = @transform_10, window_bounds = array<i64: 1, 48, 256>}]} {
    %c0 = arith.constant 0 : index
    %c0_0 = arith.constant 0 : index
    %c0_1 = arith.constant 0 : index
    %0 = vector.load %arg2[%c0, %c0_0, %c0_1] : memref<1x16x256xf32, #tpu.memory_space<vmem>>, vector<1x16x256xf32>
    %1 = vector.shape_cast %0 : vector<1x16x256xf32> to vector<16x256xf32>
    %c0_2 = arith.constant 0 : index
    %c0_3 = arith.constant 0 : index
    %2 = vector.load %arg3[%c0_2, %c0_3] : memref<8x16xf32, #tpu.memory_space<vmem>>, vector<8x16xf32>
    %cst = arith.constant dense<0.000000e+00> : vector<8x256xf32>
    %3 = tpu.matmul %2, %1, %cst {dimension_numbers = #tpu.dot_dimension_numbers<[1], [0], [0], [1], [0, 0, 1, 1], [], []>} : vector<8x16xf32>, vector<16x256xf32>, vector<8x256xf32> -> vector<8x256xf32>
    %c0_4 = arith.constant 0 : index
    %c0_5 = arith.constant 0 : index
    %4 = vector.load %arg4[%c0_4, %c0_5] : memref<8x1xf32, #tpu.memory_space<vmem>>, vector<8x1xf32>
    %5 = vector.broadcast %4 : vector<8x1xf32> to vector<8x256xf32>
    %6 = arith.addf %3, %5 : vector<8x256xf32>
    %cst_6 = arith.constant 0.000000e+00 : f32
    %7 = vector.broadcast %cst_6 : f32 to vector<8x256xf32>
    %8 = arith.maximumf %6, %7 : vector<8x256xf32>
    %c0_7 = arith.constant 0 : index
    %c0_8 = arith.constant 0 : index
    %9 = vector.load %arg5[%c0_7, %c0_8] : memref<48x8xf32, #tpu.memory_space<vmem>>, vector<48x8xf32>
    %cst_9 = arith.constant dense<0.000000e+00> : vector<48x256xf32>
    %10 = tpu.matmul %9, %8, %cst_9 {dimension_numbers = #tpu.dot_dimension_numbers<[1], [0], [0], [1], [0, 0, 1, 1], [], []>} : vector<48x8xf32>, vector<8x256xf32>, vector<48x256xf32> -> vector<48x256xf32>
    %c0_10 = arith.constant 0 : index
    %c0_11 = arith.constant 0 : index
    %11 = vector.load %arg6[%c0_10, %c0_11] : memref<48x1xf32, #tpu.memory_space<vmem>>, vector<48x1xf32>
    %12 = vector.broadcast %11 : vector<48x1xf32> to vector<48x256xf32>
    %13 = arith.addf %10, %12 : vector<48x256xf32>
    %14 = vector.extract_strided_slice %13 {offsets = [0, 0], sizes = [2, 256], strides = [1, 1]} : vector<48x256xf32> to vector<2x256xf32>
    %cst_12 = arith.constant 0.000000e+00 : f32
    %15 = vector.broadcast %cst_12 : f32 to vector<2x256xf32>
    %16 = arith.maximumf %14, %15 : vector<2x256xf32>
    %17 = vector.broadcast %cst_12 : f32 to vector<2x256xf32>
    %18 = arith.subf %14, %17 : vector<2x256xf32>
    %19 = arith.cmpf one, %18, %18 : vector<2x256xf32>
    %20 = vector.broadcast %cst_12 : f32 to vector<2x256xf32>
    %21 = arith.addf %14, %20 : vector<2x256xf32>
    %22 = math.absf %18 : vector<2x256xf32>
    %cst_13 = arith.constant 0.000000e+00 : f32
    %23 = vector.broadcast %cst_13 : f32 to vector<2x256xf32>
    %24 = arith.subf %23, %22 : vector<2x256xf32>
    %25 = math.exp %24 : vector<2x256xf32>
    %26 = math.log1p %25 : vector<2x256xf32>
    %27 = arith.addf %16, %26 : vector<2x256xf32>
    %28 = arith.select %19, %21, %27 : vector<2x256xi1>, vector<2x256xf32>
    %cst_14 = arith.constant dense<0.000000e+00> : vector<256xf32>
    %29 = vector.multi_reduction <add>, %1, %cst_14 [0] : vector<16x256xf32> to vector<256xf32>
    %30 = vector.shape_cast %29 : vector<256xf32> to vector<1x256xf32>
    %cst_15 = arith.constant 1.600000e+01 : f32
    %31 = vector.broadcast %cst_15 : f32 to vector<1x256xf32>
    %32 = arith.divf %30, %31 : vector<1x256xf32>
    %c0_16 = arith.constant 0 : index
    %c0_17 = arith.constant 0 : index
    %33 = vector.load %arg7[%c0_16, %c0_17] : memref<16x8xf32, #tpu.memory_space<vmem>>, vector<16x8xf32>
    %cst_18 = arith.constant dense<0.000000e+00> : vector<16x256xf32>
    %34 = tpu.matmul %33, %8, %cst_18 {dimension_numbers = #tpu.dot_dimension_numbers<[1], [0], [0], [1], [0, 0, 1, 1], [], []>} : vector<16x8xf32>, vector<8x256xf32>, vector<16x256xf32> -> vector<16x256xf32>
    %c0_19 = arith.constant 0 : index
    %c0_20 = arith.constant 0 : index
    %35 = vector.load %arg8[%c0_19, %c0_20] : memref<16x1xf32, #tpu.memory_space<vmem>>, vector<16x1xf32>
    %36 = vector.broadcast %35 : vector<16x1xf32> to vector<16x256xf32>
    %37 = arith.addf %34, %36 : vector<16x256xf32>
    %38 = vector.extract_strided_slice %28 {offsets = [0, 0], sizes = [1, 256], strides = [1, 1]} : vector<2x256xf32> to vector<1x256xf32>
    %c0_21 = arith.constant 0 : index
    %c0_22 = arith.constant 0 : index
    %c0_23 = arith.constant 0 : index
    %39 = vector.load %arg9[%c0_21, %c0_22, %c0_23] : memref<1x16x1xf32, #tpu.memory_space<vmem>>, vector<1x16x1xf32>
    %40 = vector.shape_cast %39 : vector<1x16x1xf32> to vector<16x1xf32>
    %41 = vector.broadcast %38 : vector<1x256xf32> to vector<16x256xf32>
    %42 = vector.broadcast %40 : vector<16x1xf32> to vector<16x256xf32>
    %43 = arith.mulf %41, %42 : vector<16x256xf32>
    %44 = arith.addf %37, %43 : vector<16x256xf32>
    %45 = vector.extract_strided_slice %28 {offsets = [1, 0], sizes = [1, 256], strides = [1, 1]} : vector<2x256xf32> to vector<1x256xf32>
    %c0_24 = arith.constant 0 : index
    %c0_25 = arith.constant 0 : index
    %c0_26 = arith.constant 0 : index
    %46 = vector.load %arg10[%c0_24, %c0_25, %c0_26] : memref<1x16x1xf32, #tpu.memory_space<vmem>>, vector<1x16x1xf32>
    %47 = vector.shape_cast %46 : vector<1x16x1xf32> to vector<16x1xf32>
    %48 = vector.broadcast %45 : vector<1x256xf32> to vector<16x256xf32>
    %49 = vector.broadcast %47 : vector<16x1xf32> to vector<16x256xf32>
    %50 = arith.mulf %48, %49 : vector<16x256xf32>
    %51 = arith.addf %44, %50 : vector<16x256xf32>
    %52 = vector.broadcast %32 : vector<1x256xf32> to vector<16x256xf32>
    %53 = arith.mulf %52, %51 : vector<16x256xf32>
    %c0_27 = arith.constant 0 : index
    %c0_28 = arith.constant 0 : index
    %c0_29 = arith.constant 0 : index
    %54 = vector.load %arg11[%c0_27, %c0_28, %c0_29] : memref<1x16x256xf32, #tpu.memory_space<vmem>>, vector<1x16x256xf32>
    %55 = vector.shape_cast %54 : vector<1x16x256xf32> to vector<16x256xf32>
    %56 = vector.shape_cast %53 : vector<16x256xf32> to vector<1x16x256xf32>
    tpu.vector_store %arg11[%c0_27, %c0_28, %c0_29], %56 {strides = array<i32>} : memref<1x16x256xf32, #tpu.memory_space<vmem>>, vector<1x16x256xf32>,
    %c0_30 = arith.constant 0 : index
    %c0_31 = arith.constant 0 : index
    %c0_32 = arith.constant 0 : index
    %57 = vector.load %arg12[%c0_30, %c0_31, %c0_32] : memref<1x48x256xf32, #tpu.memory_space<vmem>>, vector<1x48x256xf32>
    %58 = vector.shape_cast %57 : vector<1x48x256xf32> to vector<48x256xf32>
    %59 = vector.shape_cast %13 : vector<48x256xf32> to vector<1x48x256xf32>
    tpu.vector_store %arg12[%c0_30, %c0_31, %c0_32], %59 {strides = array<i32>} : memref<1x48x256xf32, #tpu.memory_space<vmem>>, vector<1x48x256xf32>,
    %c0_33 = arith.constant 0 : index
    %c0_34 = arith.constant 0 : index
    %c0_35 = arith.constant 0 : index
    %60 = vector.load %arg12[%c0_33, %c0_34, %c0_35] : memref<1x48x256xf32, #tpu.memory_space<vmem>>, vector<1x2x256xf32>
    %61 = vector.shape_cast %60 : vector<1x2x256xf32> to vector<2x256xf32>
    %62 = vector.shape_cast %28 : vector<2x256xf32> to vector<1x2x256xf32>
    tpu.vector_store %arg12[%c0_33, %c0_34, %c0_35], %62 {strides = array<i32>} : memref<1x48x256xf32, #tpu.memory_space<vmem>>, vector<1x2x256xf32>,
    return
  }
  func.func @transform_0(%arg0: i32, %arg1: i32) -> (i32, i32, i32) {
    %c0_i32 = arith.constant 0 : i32
    %c0_i32_0 = arith.constant 0 : i32
    return %arg0, %c0_i32, %arg1 : i32, i32, i32
  }
  func.func @transform_1(%arg0: i32, %arg1: i32) -> (i32, i32) {
    %c0_i32 = arith.constant 0 : i32
    %c0_i32_0 = arith.constant 0 : i32
    %c0_i32_1 = arith.constant 0 : i32
    return %c0_i32, %c0_i32_0 : i32, i32
  }
  func.func @transform_2(%arg0: i32, %arg1: i32) -> (i32, i32) {
    %c0_i32 = arith.constant 0 : i32
    %c0_i32_0 = arith.constant 0 : i32
    %c0_i32_1 = arith.constant 0 : i32
    return %c0_i32, %c0_i32_0 : i32, i32
  }
  func.func @transform_3(%arg0: i32, %arg1: i32) -> (i32, i32) {
    %c0_i32 = arith.constant 0 : i32
    %c0_i32_0 = arith.constant 0 : i32
    %c0_i32_1 = arith.constant 0 : i32
    return %c0_i32, %c0_i32_0 : i32, i32
  }
  func.func @transform_4(%arg0: i32, %arg1: i32) -> (i32, i32) {
    %c0_i32 = arith.constant 0 : i32
    %c0_i32_0 = arith.constant 0 : i32
    %c0_i32_1 = arith.constant 0 : i32
    return %c0_i32, %c0_i32_0 : i32, i32
  }
  func.func @transform_5(%arg0: i32, %arg1: i32) -> (i32, i32) {
    %c0_i32 = arith.constant 0 : i32
    %c0_i32_0 = arith.constant 0 : i32
    %c0_i32_1 = arith.constant 0 : i32
    return %c0_i32, %c0_i32_0 : i32, i32
  }
  func.func @transform_6(%arg0: i32, %arg1: i32) -> (i32, i32) {
    %c0_i32 = arith.constant 0 : i32
    %c0_i32_0 = arith.constant 0 : i32
    %c0_i32_1 = arith.constant 0 : i32
    return %c0_i32, %c0_i32_0 : i32, i32
  }
  func.func @transform_7(%arg0: i32, %arg1: i32) -> (i32, i32, i32) {
    %c0_i32 = arith.constant 0 : i32
    %c0_i32_0 = arith.constant 0 : i32
    %c0_i32_1 = arith.constant 0 : i32
    return %arg0, %c0_i32, %c0_i32_0 : i32, i32, i32
  }
  func.func @transform_8(%arg0: i32, %arg1: i32) -> (i32, i32, i32) {
    %c0_i32 = arith.constant 0 : i32
    %c0_i32_0 = arith.constant 0 : i32
    %c0_i32_1 = arith.constant 0 : i32
    return %arg0, %c0_i32, %c0_i32_0 : i32, i32, i32
  }
  func.func @transform_9(%arg0: i32, %arg1: i32) -> (i32, i32, i32) {
    %c0_i32 = arith.constant 0 : i32
    %c0_i32_0 = arith.constant 0 : i32
    return %arg0, %c0_i32, %arg1 : i32, i32, i32
  }
  func.func @transform_10(%arg0: i32, %arg1: i32) -> (i32, i32, i32) {
    %c0_i32 = arith.constant 0 : i32
    %c0_i32_0 = arith.constant 0 : i32
    return %arg0, %c0_i32, %arg1 : i32, i32, i32
  }
}

</mosaic_0001>

<llo_original>
// kernel: neg.2
$region0: #{neg.2}
  #allocation0 [shape = 's32[1]{0}', space=sflag, size = 0x4, scoped, tag = 'scoped memory for neg.2']
  %s0 = inlined_call_operand.vmem [shape: f32[2,16,1], index: 0, kind: input, shape index: {}]
  %s1 = inlined_call_operand.vmem [shape: f32[2,16,1], index: 1, kind: output, shape index: {}]
  %v2 = vld [vmem:[%s0] sm:$0x3]
  %3 = xla_tuple %v2
  %4 = xla_tuple %3
  %v5 = vxor.u32 %v2, 2147483648
  %6 = xla_tuple %v5
  %7 = vst [vmem:[%s1] sm:$0x3] %v5

// kernel: model_forward.1
$region0: #{model_forward.1}
  #allocation0 [shape = 'u32[]', space=smem, size = 0x4, offset = 0x4, fixed_abs, tag = 'smem constant byte address 0x4 - core index']
  #allocation1 [shape = 'u32[144,128]{1,0:T(1,128)}', space=vmem, size = 0x12000, scoped, tag = 'internal scratch']
  %s0 = inlined_call_operand.vmem [shape: f32[2,16,768], index: 0, kind: input, shape index: {}]
  %s1 = inlined_call_operand.vmem [shape: f32[8,16], index: 1, kind: input, shape index: {}]
  %s2 = inlined_call_operand.vmem [shape: f32[8,1], index: 2, kind: input, shape index: {}]
  %s3 = inlined_call_operand.vmem [shape: f32[48,8], index: 3, kind: input, shape index: {}]
  %s4 = inlined_call_operand.vmem [shape: f32[48,1], index: 4, kind: input, shape index: {}]
  %s5 = inlined_call_operand.vmem [shape: f32[16,8], index: 5, kind: input, shape index: {}]
  %s6 = inlined_call_operand.vmem [shape: f32[16,1], index: 6, kind: input, shape index: {}]
  %s7 = inlined_call_operand.vmem [shape: f32[2,16,1], index: 7, kind: input, shape index: {}]
  %s8 = inlined_call_operand.vmem [shape: f32[2,16,1], index: 8, kind: input, shape index: {}]
  %s9 = inlined_call_operand.vmem [shape: f32[2,16,768], index: 9, kind: output, shape index: {0}]
  %s10 = inlined_call_operand.vmem [shape: f32[2,48,768], index: 10, kind: output, shape index: {1}]
  %11 = xla_tuple %s9, %s10
  %s12 = sld [smem:[#allocation0]]
  $region138: #{model_forward.1} parent=0
    _
  %s14 = ssub.s32 1, %s12
  %s15 = scalar_select 0, %s14, %s12
  $region1: #{model_forward.1} parent=0
    #allocation2 [shape = 'u8[32768]{0}', space=vmem, size = 0x8000, scoped, tag = 'input window, operand 0']
    #allocation3 [shape = 'u8[32768]{0}', space=vmem, size = 0x8000, scoped, tag = 'output window, operand 0']
    #allocation4 [shape = 'u8[98304]{0}', space=vmem, size = 0x18000, scoped, tag = 'output window, operand 1']
    loop: start=0, step=1, limit=8
    $region2: #{model_forward.1} parent=1 // loop_pre_header
      _
    $region3: #{model_forward.1} parent=1 // loop_header
      %s17 = sphi 0, %s21
      %p18 = scmp.ge.s32.totalorder %s17, 8
      %s24 = sphi 0, %s36
      %s25 = sphi 0, %s32
      %s26 = sphi 0, %s24
      %s27 = sphi 0, %s25
      %s28 = sphi 0, %s26
      %s29 = sphi 0, %s27
      %s41 = sphi 0, %s43
      %s44 = sphi 0, %s41
      %s45 = sphi 0, %s44
      %s61 = sphi 0, %s45
      %s65 = sphi 0, %s65
      %s67 = sphi 0, %s65
      %s68 = sphi 0, %s67
      %s82 = sphi 0, %s68
      %s86 = sphi 0, %s86
      %s88 = sphi 0, %s86
      %s89 = sphi 0, %s88
      %s103 = sphi 0, %s89
      %s107 = sphi 0, %s107
      %s109 = sphi 0, %s107
      %s110 = sphi 0, %s109
      %s124 = sphi 0, %s110
      %s128 = sphi 0, %s128
      %s130 = sphi 0, %s128
      %s131 = sphi 0, %s130
      %s145 = sphi 0, %s131
      %s149 = sphi 0, %s149
      %s151 = sphi 0, %s149
      %s152 = sphi 0, %s151
      %s166 = sphi 0, %s152
      %s170 = sphi 0, %s170
      %s172 = sphi 0, %s170
      %s173 = sphi 0, %s172
      %s187 = sphi 0, %s173
      %s193 = sphi 0, %s195
      %s196 = sphi 0, %s193
      %s197 = sphi 0, %s196
      %s213 = sphi 0, %s197
      %s219 = sphi 0, %s221
      %s222 = sphi 0, %s219
      %s223 = sphi 0, %s222
      %s239 = sphi 0, %s223
      %s247 = sphi 0, %s249
      %s250 = sphi 0, %s247
      %s251 = sphi 0, %s250
      %s267 = sphi 0, %s251
      %s275 = sphi 0, %s277
      %s278 = sphi 0, %s275
      %s279 = sphi 0, %s278
      %s295 = sphi 0, %s279
    $region4: #{model_forward.1} parent=1 // loop_header_branch
      %20 = sbr.rel (%p18) target = $region8
    $region5: #{model_forward.1} parent=1 // loop_body
      %s22 = ssub.s32 %s17, 1
      %s23 = ssub.s32 %s17, 2
      %s30 = sadd.s32 1, %s25
      %p31 = scmp.ge.s32.totalorder %s30, 3
      %s32 = scalar_select %p31, 0, %s30
      %s33 = sadd.s32 1, %s24
      %s34 = scalar_select %p31, %s33, %s24
      %p35 = scmp.ge.s32.totalorder %s34, 2
      %s36 = scalar_select %p35, 0, %s34
      %s37 = ssub.s32 %s24, %s36
      %s38 = ssub.s32 %s25, %s32
      %s39 = sor.u32 %s37, %s38
      %p40 = scmp.eq.s32.totalorder %s39, 0
      %s42 = sadd.s32 %s41, 1
      %s43 = scalar_select %p40, %s41, %s42
      %p46 = pneg %p40
      %p47 = scmp.eq.s32.totalorder %s17, 5
      %p48 = por %p46, %p47
      %p49 = scmp.ne.s32.totalorder %s41, %s44
      %p50 = scmp.eq.s32.totalorder %s17, 0
      %p51 = por %p49, %p50
      %p52 = scmp.ne.s32.totalorder %s41, %s44
      %p53 = scmp.eq.s32.totalorder %s22, 5
      %p54 = por %p52, %p53
      %p55 = scmp.ne.s32.totalorder %s44, %s45
      %p56 = scmp.eq.s32.totalorder %s22, 0
      %p57 = por %p55, %p56
      %p58 = scmp.ne.s32.totalorder %s44, %s45
      %p59 = scmp.eq.s32.totalorder %s23, 5
      %p60 = por %p58, %p59
      %p62 = scmp.ne.s32.totalorder %s45, %s61
      %p63 = scmp.eq.s32.totalorder %s23, 0
      %p64 = por %p62, %p63
      %s66 = sadd.s32 %s65, 1
      %p69 = scmp.eq.s32.totalorder %s17, 5
      %p70 = scmp.ne.s32.totalorder %s65, %s67
      %p71 = scmp.eq.s32.totalorder %s17, 0
      %p72 = por %p70, %p71
      %p73 = scmp.ne.s32.totalorder %s65, %s67
      %p74 = scmp.eq.s32.totalorder %s22, 5
      %p75 = por %p73, %p74
      %p76 = scmp.ne.s32.totalorder %s67, %s68
      %p77 = scmp.eq.s32.totalorder %s22, 0
      %p78 = por %p76, %p77
      %p79 = scmp.ne.s32.totalorder %s67, %s68
      %p80 = scmp.eq.s32.totalorder %s23, 5
      %p81 = por %p79, %p80
      %p83 = scmp.ne.s32.totalorder %s68, %s82
      %p84 = scmp.eq.s32.totalorder %s23, 0
      %p85 = por %p83, %p84
      %s87 = sadd.s32 %s86, 1
      %p90 = scmp.eq.s32.totalorder %s17, 5
      %p91 = scmp.ne.s32.totalorder %s86, %s88
      %p92 = scmp.eq.s32.totalorder %s17, 0
      %p93 = por %p91, %p92
      %p94 = scmp.ne.s32.totalorder %s86, %s88
      %p95 = scmp.eq.s32.totalorder %s22, 5
      %p96 = por %p94, %p95
      %p97 = scmp.ne.s32.totalorder %s88, %s89
      %p98 = scmp.eq.s32.totalorder %s22, 0
      %p99 = por %p97, %p98
      %p100 = scmp.ne.s32.totalorder %s88, %s89
      %p101 = scmp.eq.s32.totalorder %s23, 5
      %p102 = por %p100, %p101
      %p104 = scmp.ne.s32.totalorder %s89, %s103
      %p105 = scmp.eq.s32.totalorder %s23, 0
      %p106 = por %p104, %p105
      %s108 = sadd.s32 %s107, 1
      %p111 = scmp.eq.s32.totalorder %s17, 5
      %p112 = scmp.ne.s32.totalorder %s107, %s109
      %p113 = scmp.eq.s32.totalorder %s17, 0
      %p114 = por %p112, %p113
      %p115 = scmp.ne.s32.totalorder %s107, %s109
      %p116 = scmp.eq.s32.totalorder %s22, 5
      %p117 = por %p115, %p116
      %p118 = scmp.ne.s32.totalorder %s109, %s110
      %p119 = scmp.eq.s32.totalorder %s22, 0
      %p120 = por %p118, %p119
      %p121 = scmp.ne.s32.totalorder %s109, %s110
      %p122 = scmp.eq.s32.totalorder %s23, 5
      %p123 = por %p121, %p122
      %p125 = scmp.ne.s32.totalorder %s110, %s124
      %p126 = scmp.eq.s32.totalorder %s23, 0
      %p127 = por %p125, %p126
      %s129 = sadd.s32 %s128, 1
      %p132 = scmp.eq.s32.totalorder %s17, 5
      %p133 = scmp.ne.s32.totalorder %s128, %s130
      %p134 = scmp.eq.s32.totalorder %s17, 0
      %p135 = por %p133, %p134
      %p136 = scmp.ne.s32.totalorder %s128, %s130
      %p137 = scmp.eq.s32.totalorder %s22, 5
      %p138 = por %p136, %p137
      %p139 = scmp.ne.s32.totalorder %s130, %s131
      %p140 = scmp.eq.s32.totalorder %s22, 0
      %p141 = por %p139, %p140
      %p142 = scmp.ne.s32.totalorder %s130, %s131
      %p143 = scmp.eq.s32.totalorder %s23, 5
      %p144 = por %p142, %p143
      %p146 = scmp.ne.s32.totalorder %s131, %s145
      %p147 = scmp.eq.s32.totalorder %s23, 0
      %p148 = por %p146, %p147
      %s150 = sadd.s32 %s149, 1
      %p153 = scmp.eq.s32.totalorder %s17, 5
      %p154 = scmp.ne.s32.totalorder %s149, %s151
      %p155 = scmp.eq.s32.totalorder %s17, 0
      %p156 = por %p154, %p155
      %p157 = scmp.ne.s32.totalorder %s149, %s151
      %p158 = scmp.eq.s32.totalorder %s22, 5
      %p159 = por %p157, %p158
      %p160 = scmp.ne.s32.totalorder %s151, %s152
      %p161 = scmp.eq.s32.totalorder %s22, 0
      %p162 = por %p160, %p161
      %p163 = scmp.ne.s32.totalorder %s151, %s152
      %p164 = scmp.eq.s32.totalorder %s23, 5
      %p165 = por %p163, %p164
      %p167 = scmp.ne.s32.totalorder %s152, %s166
      %p168 = scmp.eq.s32.totalorder %s23, 0
      %p169 = por %p167, %p168
      %s171 = sadd.s32 %s170, 1
      %p174 = scmp.eq.s32.totalorder %s17, 5
      %p175 = scmp.ne.s32.totalorder %s170, %s172
      %p176 = scmp.eq.s32.totalorder %s17, 0
      %p177 = por %p175, %p176
      %p178 = scmp.ne.s32.totalorder %s170, %s172
      %p179 = scmp.eq.s32.totalorder %s22, 5
      %p180 = por %p178, %p179
      %p181 = scmp.ne.s32.totalorder %s172, %s173
      %p182 = scmp.eq.s32.totalorder %s22, 0
      %p183 = por %p181, %p182
      %p184 = scmp.ne.s32.totalorder %s172, %s173
      %p185 = scmp.eq.s32.totalorder %s23, 5
      %p186 = por %p184, %p185
      %p188 = scmp.ne.s32.totalorder %s173, %s187
      %p189 = scmp.eq.s32.totalorder %s23, 0
      %p190 = por %p188, %p189
      %s191 = ssub.s32 %s24, %s36
      %p192 = scmp.eq.s32.totalorder %s191, 0
      %s194 = sadd.s32 %s193, 1
      %s195 = scalar_select %p192, %s193, %s194
      %p198 = pneg %p192
      %p199 = scmp.eq.s32.totalorder %s17, 5
      %p200 = por %p198, %p199
      %p201 = scmp.ne.s32.totalorder %s193, %s196
      %p202 = scmp.eq.s32.totalorder %s17, 0
      %p203 = por %p201, %p202
      %p204 = scmp.ne.s32.totalorder %s193, %s196
      %p205 = scmp.eq.s32.totalorder %s22, 5
      %p206 = por %p204, %p205
      %p207 = scmp.ne.s32.totalorder %s196, %s197
      %p208 = scmp.eq.s32.totalorder %s22, 0
      %p209 = por %p207, %p208
      %p210 = scmp.ne.s32.totalorder %s196, %s197
      %p211 = scmp.eq.s32.totalorder %s23, 5
      %p212 = por %p210, %p211
      %p214 = scmp.ne.s32.totalorder %s197, %s213
      %p215 = scmp.eq.s32.totalorder %s23, 0
      %p216 = por %p214, %p215
      %s217 = ssub.s32 %s24, %s36
      %p218 = scmp.eq.s32.totalorder %s217, 0
      %s220 = sadd.s32 %s219, 1
      %s221 = scalar_select %p218, %s219, %s220
      %p224 = pneg %p218
      %p225 = scmp.eq.s32.totalorder %s17, 5
      %p226 = por %p224, %p225
      %p227 = scmp.ne.s32.totalorder %s219, %s222
      %p228 = scmp.eq.s32.totalorder %s17, 0
      %p229 = por %p227, %p228
      %p230 = scmp.ne.s32.totalorder %s219, %s222
      %p231 = scmp.eq.s32.totalorder %s22, 5
      %p232 = por %p230, %p231
      %p233 = scmp.ne.s32.totalorder %s222, %s223
      %p234 = scmp.eq.s32.totalorder %s22, 0
      %p235 = por %p233, %p234
      %p236 = scmp.ne.s32.totalorder %s222, %s223
      %p237 = scmp.eq.s32.totalorder %s23, 5
      %p238 = por %p236, %p237
      %p240 = scmp.ne.s32.totalorder %s223, %s239
      %p241 = scmp.eq.s32.totalorder %s23, 0
      %p242 = por %p240, %p241
      %s243 = ssub.s32 %s24, %s36
      %s244 = ssub.s32 %s25, %s32
      %s245 = sor.u32 %s243, %s244
      %p246 = scmp.eq.s32.totalorder %s245, 0
      %s248 = sadd.s32 %s247, 1
      %s249 = scalar_select %p246, %s247, %s248
      %p252 = pneg %p246
      %p253 = scmp.eq.s32.totalorder %s17, 5
      %p254 = por %p252, %p253
      %p255 = scmp.ne.s32.totalorder %s247, %s250
      %p256 = scmp.eq.s32.totalorder %s17, 0
      %p257 = por %p255, %p256
      %p258 = scmp.ne.s32.totalorder %s247, %s250
      %p259 = scmp.eq.s32.totalorder %s22, 5
      %p260 = por %p258, %p259
      %p261 = scmp.ne.s32.totalorder %s250, %s251
      %p262 = scmp.eq.s32.totalorder %s22, 0
      %p263 = por %p261, %p262
      %p264 = scmp.ne.s32.totalorder %s250, %s251
      %p265 = scmp.eq.s32.totalorder %s23, 5
      %p266 = por %p264, %p265
      %p268 = scmp.ne.s32.totalorder %s251, %s267
      %p269 = scmp.eq.s32.totalorder %s23, 0
      %p270 = por %p268, %p269
      %s271 = ssub.s32 %s24, %s36
      %s272 = ssub.s32 %s25, %s32
      %s273 = sor.u32 %s271, %s272
      %p274 = scmp.eq.s32.totalorder %s273, 0
      %s276 = sadd.s32 %s275, 1
      %s277 = scalar_select %p274, %s275, %s276
      %p280 = pneg %p274
      %p281 = scmp.eq.s32.totalorder %s17, 5
      %p282 = por %p280, %p281
      %p283 = scmp.ne.s32.totalorder %s275, %s278
      %p284 = scmp.eq.s32.totalorder %s17, 0
      %p285 = por %p283, %p284
      %p286 = scmp.ne.s32.totalorder %s275, %s278
      %p287 = scmp.eq.s32.totalorder %s22, 5
      %p288 = por %p286, %p287
      %p289 = scmp.ne.s32.totalorder %s278, %s279
      %p290 = scmp.eq.s32.totalorder %s22, 0
      %p291 = por %p289, %p290
      %p292 = scmp.ne.s32.totalorder %s278, %s279
      %p293 = scmp.eq.s32.totalorder %s23, 5
      %p294 = por %p292, %p293
      %p296 = scmp.ne.s32.totalorder %s279, %s295
      %p297 = scmp.eq.s32.totalorder %s23, 0
      %p298 = por %p296, %p297
      %p299 = scmp.le.s32.totalorder 1, %s17
      %p300 = scmp.lt.s32.totalorder %s17, 7
      %p301 = pnand %p299, %p300
      %p302 = pneg %p301
      // Predicated region
      $region9: #{model_forward.1} parent=5 // pred_check
        _
      $region10: #{model_forward.1} parent=5 // pred_check_branch
        %304 = sbr.rel (%p301) target = $region12
      $region11: #{model_forward.1} parent=5 // pred_region
        %s305 = ssub.s32 %s17, 1
        // Predicated region
        $region13: #{model_forward.1} parent=11 // pred_check
          %p306 = pneg %p78
        $region14: #{model_forward.1} parent=11 // pred_check_branch
          %308 = sbr.rel (%p306) target = $region16
        $region15: #{model_forward.1} parent=11 // pred_region
          _
        $region16: #{model_forward.1} parent=11 // pred_fallthru
          _
        // Predicated region
        $region17: #{model_forward.1} parent=11 // pred_check
          %p309 = pneg %p99
        $region18: #{model_forward.1} parent=11 // pred_check_branch
          %311 = sbr.rel (%p309) target = $region20
        $region19: #{model_forward.1} parent=11 // pred_region
          _
        $region20: #{model_forward.1} parent=11 // pred_fallthru
          _
        // Predicated region
        $region21: #{model_forward.1} parent=11 // pred_check
          %p312 = pneg %p120
        $region22: #{model_forward.1} parent=11 // pred_check_branch
          %314 = sbr.rel (%p312) target = $region24
        $region23: #{model_forward.1} parent=11 // pred_region
          _
        $region24: #{model_forward.1} parent=11 // pred_fallthru
          _
        // Predicated region
        $region25: #{model_forward.1} parent=11 // pred_check
          %p315 = pneg %p141
        $region26: #{model_forward.1} parent=11 // pred_check_branch
          %317 = sbr.rel (%p315) target = $region28
        $region27: #{model_forward.1} parent=11 // pred_region
          _
        $region28: #{model_forward.1} parent=11 // pred_fallthru
          _
        // Predicated region
        $region29: #{model_forward.1} parent=11 // pred_check
          %p318 = pneg %p162
        $region30: #{model_forward.1} parent=11 // pred_check_branch
          %320 = sbr.rel (%p318) target = $region32
        $region31: #{model_forward.1} parent=11 // pred_region
          _
        $region32: #{model_forward.1} parent=11 // pred_fallthru
          _
        // Predicated region
        $region33: #{model_forward.1} parent=11 // pred_check
          %p321 = pneg %p183
        $region34: #{model_forward.1} parent=11 // pred_check_branch
          %323 = sbr.rel (%p321) target = $region36
        $region35: #{model_forward.1} parent=11 // pred_region
          _
        $region36: #{model_forward.1} parent=11 // pred_fallthru
          _
      $region12: #{model_forward.1} parent=5 // pred_fallthru
        _
      %p324 = scmp.lt.s32.totalorder %s17, 6
      // Predicated region
      $region37: #{model_forward.1} parent=5 // pred_check
        %p325 = pneg %p324
      $region38: #{model_forward.1} parent=5 // pred_check_branch
        %327 = sbr.rel (%p325) target = $region40
      $region39: #{model_forward.1} parent=5 // pred_region
        // Predicated region
        $region41: #{model_forward.1} parent=39 // pred_check
          %p328 = pneg %p51
        $region42: #{model_forward.1} parent=39 // pred_check_branch
          %330 = sbr.rel (%p328) target = $region44
        $region43: #{model_forward.1} parent=39 // pred_region
          %s331 = sand.u32 %s41, 1
          %s332 = sand.u32 %s41, 1
          %s333 = smul.addr %s332, 32
          %s334 = scalar_lea.vmem [#allocation2], %s333
          %s335 = smul.u32 2, %s25
          %s336 = smul.addr %s24, 12
          %s337 = sadd.s32 %s335, %s336
          %s338 = smul.addr %s337, 8
          %s339 = scalar_lea.vmem %s0, %s338
          // Predicated region
          $region45: #{model_forward.1} parent=43 // pred_check
            _
          $region46: #{model_forward.1} parent=43 // pred_check_branch
            %341 = sbr.rel (0) target = $region48
          $region47: #{model_forward.1} parent=43 // pred_region
            // Predicated region
            $region49: #{model_forward.1} parent=47 // pred_check
              _
            $region50: #{model_forward.1} parent=47 // pred_check_branch
              %343 = sbr.rel (0) target = $region52
            $region51: #{model_forward.1} parent=47 // pred_region
              loop: start=0, step=1, limit=1
              $region53: #{model_forward.1} parent=51 // loop_pre_header
                _
              $region54: #{model_forward.1} parent=51 // loop_header
                %s345 = sphi 0, %s349
                %p346 = scmp.ge.s32.totalorder %s345, 1
                %s350 = sphi %s339, %s339
                %s351 = sphi %s334, %s334
              $region55: #{model_forward.1} parent=51 // loop_header_branch
                %348 = sbr.rel (%p346) target = $region59
              $region56: #{model_forward.1} parent=51 // loop_body
                %v352 = vld [vmem:[%s350] sm:$0xff]
                %353 = vst [vmem:[%s351] sm:$0xff] %v352
                %v354 = vld [vmem:[%s350 + $0x8] sm:$0xff]
                %355 = vst [vmem:[%s351 + $0x8] sm:$0xff] %v354
                %v356 = vld [vmem:[%s350 + $0x30] sm:$0xff]
                %357 = vst [vmem:[%s351 + $0x10] sm:$0xff] %v356
                %v358 = vld [vmem:[%s350 + $0x38] sm:$0xff]
                %359 = vst [vmem:[%s351 + $0x18] sm:$0xff] %v358
              $region57: #{model_forward.1} parent=51 // loop_footer
                %s349 = sadd.s32 1, %s345
              $region58: #{model_forward.1} parent=51 // loop_footer_branch
                %344 = sbr.rel target = $region54
              $region59: #{model_forward.1} parent=51 // loop_exit
                _
            $region52: #{model_forward.1} parent=47 // pred_fallthru
              _
            // Predicated region
            $region60: #{model_forward.1} parent=47 // pred_check
              _
            $region61: #{model_forward.1} parent=47 // pred_check_branch
              %361 = sbr.rel target = $region63
            $region62: #{model_forward.1} parent=47 // pred_region
              _
            $region63: #{model_forward.1} parent=47 // pred_fallthru
              _
          $region48: #{model_forward.1} parent=43 // pred_fallthru
            _
          %362 = vnop
        $region44: #{model_forward.1} parent=39 // pred_fallthru
          _
        // Predicated region
        $region64: #{model_forward.1} parent=39 // pred_check
          %p363 = pneg %p203
        $region65: #{model_forward.1} parent=39 // pred_check_branch
          %365 = sbr.rel (%p363) target = $region67
        $region66: #{model_forward.1} parent=39 // pred_region
          %p366 = scmp.lt.s32.totalorder %s24, 1
          %s367 = scalar_select %p366, %s24, 1
          %s368 = smul.addr %s367, 2
          %s369 = smul.addr %s368, 8
          %s370 = scalar_lea.vmem %s7, %s369
        $region67: #{model_forward.1} parent=39 // pred_fallthru
          _
        // Predicated region
        $region68: #{model_forward.1} parent=39 // pred_check
          %p371 = pneg %p229
        $region69: #{model_forward.1} parent=39 // pred_check_branch
          %373 = sbr.rel (%p371) target = $region71
        $region70: #{model_forward.1} parent=39 // pred_region
          %p374 = scmp.lt.s32.totalorder %s24, 1
          %s375 = scalar_select %p374, %s24, 1
          %s376 = smul.addr %s375, 2
          %s377 = smul.addr %s376, 8
          %s378 = scalar_lea.vmem %s8, %s377
        $region71: #{model_forward.1} parent=39 // pred_fallthru
          _
      $region40: #{model_forward.1} parent=5 // pred_fallthru
        _
      %p379 = scmp.le.s32.totalorder 1, %s17
      %p380 = scmp.lt.s32.totalorder %s17, 7
      %p381 = pnand %p379, %p380
      %p382 = pneg %p381
      // Predicated region
      $region72: #{model_forward.1} parent=5 // pred_check
        _
      $region73: #{model_forward.1} parent=5 // pred_check_branch
        %384 = sbr.rel (%p381) target = $region75
      $region74: #{model_forward.1} parent=5 // pred_region
        %s385 = ssub.s32 %s17, 1
        %s386 = sand.u32 %s44, 1
        %s387 = sand.u32 %s44, 1
        %s388 = smul.addr %s387, 32
        %s389 = scalar_lea.vmem [#allocation2], %s388
        // Predicated region
        $region76: #{model_forward.1} parent=74 // pred_check
          %p390 = pneg %p57
        $region77: #{model_forward.1} parent=74 // pred_check_branch
          %392 = sbr.rel (%p390) target = $region79
        $region78: #{model_forward.1} parent=74 // pred_region
          _
        $region79: #{model_forward.1} parent=74 // pred_fallthru
          _
        %s393 = sand.u32 %s44, 1
        %s394 = sand.u32 %s44, 1
        %s395 = smul.addr %s394, 32
        %s396 = scalar_lea.vmem [#allocation2], %s395
        %p397 = pneg %p57
        %p398 = pneg %p54
        %p399 = pneg %p78
        %p400 = pneg %p75
        %p401 = pneg %p99
        %p402 = pneg %p96
        %p403 = pneg %p120
        %p404 = pneg %p117
        %p405 = pneg %p141
        %p406 = pneg %p138
        %p407 = pneg %p162
        %p408 = pneg %p159
        %p409 = pneg %p183
        %p410 = pneg %p180
        %p411 = scmp.lt.s32.totalorder %s26, 1
        %s412 = scalar_select %p411, %s26, 1
        %s413 = smul.addr %s412, 2
        %s414 = smul.addr %s413, 8
        %s415 = scalar_lea.vmem %s7, %s414
        %p416 = pneg %p209
        %p417 = pneg %p206
        %p418 = scmp.lt.s32.totalorder %s26, 1
        %s419 = scalar_select %p418, %s26, 1
        %s420 = smul.addr %s419, 2
        %s421 = smul.addr %s420, 8
        %s422 = scalar_lea.vmem %s8, %s421
        %p423 = pneg %p235
        %p424 = pneg %p232
        %p425 = pneg %p263
        %p426 = pneg %p260
        %s427 = sand.u32 %s250, 1
        %s428 = sand.u32 %s250, 1
        %s429 = smul.addr %s428, 32
        %s430 = scalar_lea.vmem [#allocation3], %s429
        %p431 = pneg %p291
        %p432 = pneg %p288
        %s433 = sand.u32 %s278, 1
        %s434 = sand.u32 %s278, 1
        %s435 = smul.addr %s434, 96
        %s436 = scalar_lea.vmem [#allocation4], %s435
        %s437 = smul.u32 2, %s27
        %p438 = scmp.lt.s32.totalorder %s26, 1
        %s439 = scalar_select %p438, %s26, 1
        %s440 = smul.addr %s439, 2
        %s441 = smul.addr %s440, 8
        %s442 = scalar_lea.vmem %s7, %s441
        %p443 = scmp.lt.s32.totalorder %s26, 1
        %s444 = scalar_select %p443, %s26, 1
        %s445 = smul.addr %s444, 2
        %s446 = smul.addr %s445, 8
        %s447 = scalar_lea.vmem %s8, %s446
        %s448 = smul.u32 2, %s27
        %s449 = smul.u32 2, %s27
        %v450 = vld [vmem:[%s389] sm:$0xff]
        %v451 = vld [vmem:[%s389 + $0x8] sm:$0xff]
        %v452 = vld [vmem:[%s389 + $0x10] sm:$0xff]
        %v453 = vld [vmem:[%s389 + $0x18] sm:$0xff]
        %v454 = vld [vmem:[%s1] sm:$0xff]
        %v455 = vld [vmem:[%s2] sm:$0xff]
        %457 = vset.pattern.permute.xlu0 0
        %458 = vperm.xlu0 %457, %v455
        %v459 = vpop.permute.xlu0 %458
        %vm461 = vcmask 130048
        %v463 = vsel %vm461, %v454, 0
        %465 = vmatprep.subr.mxu0 0.0
        %466 = vmatpush1.msra.mxu0 0.0
        %467 = vmatprep.subr.mxu0 0.0
        %468 = vmatpush1.msra.mxu0 0.0
        %469 = vmatprep.subr.mxu0 0.0
        %470 = vmatpush1.msra.mxu0 0.0
        %471 = vmatprep.subr.mxu0 0.0
        %472 = vmatpush1.msra.mxu0 0.0
        %473 = vmatprep.subr.mxu0 0.0
        %474 = vmatpush1.msra.mxu0 0.0
        %475 = vmatprep.subr.mxu0 0.0
        %476 = vmatpush1.msra.mxu0 0.0
        %477 = vmatprep.subr.mxu0 0.0
        %478 = vmatpush1.msra.mxu0 0.0
        %479 = vmatprep.subr.mxu0 0.0
        %480 = vmatpush1.msra.mxu0 0.0
        %481 = vmatprep.subr.mxu0 0.0
        %482 = vmatpush1.msra.mxu0 0.0
        %483 = vmatprep.subr.mxu0 0.0
        %484 = vmatpush1.msra.mxu0 0.0
        %485 = vmatprep.subr.mxu0 0.0
        %486 = vmatpush1.msra.mxu0 0.0
        %487 = vmatprep.subr.mxu0 0.0
        %488 = vmatpush1.msra.mxu0 0.0
        %489 = vmatprep.subr.mxu0 0.0
        %490 = vmatpush1.msra.mxu0 0.0
        %491 = vmatprep.subr.mxu0 0.0
        %492 = vmatpush1.msra.mxu0 0.0
        %493 = vmatprep.subr.mxu0 %v453
        %494 = vmatpush1.msra.mxu0 %v452
        %495 = vmatprep.subr.mxu0 %v451
        %496 = vmatpush1.msra.mxu0 %v450
        %497 = vmatprep.subr.mxu0 0.0
        %498 = vmatpush2.msra.mxu0 0.0
        %499 = vmatprep.subr.mxu0 0.0
        %500 = vmatpush2.msra.mxu0 0.0
        %501 = vmatprep.subr.mxu0 0.0
        %502 = vmatpush2.msra.mxu0 0.0
        %503 = vmatprep.subr.mxu0 0.0
        %504 = vmatpush2.msra.mxu0 0.0
        %505 = vmatprep.subr.mxu0 0.0
        %506 = vmatpush2.msra.mxu0 0.0
        %507 = vmatprep.subr.mxu0 0.0
        %508 = vmatpush2.msra.mxu0 0.0
        %509 = vmatprep.subr.mxu0 0.0
        %510 = vmatpush2.msra.mxu0 0.0
        %511 = vmatprep.subr.mxu0 0.0
        %512 = vmatpush2.msra.mxu0 0.0
        %513 = vmatprep.subr.mxu0 0.0
        %514 = vmatpush2.msra.mxu0 0.0
        %515 = vmatprep.subr.mxu0 0.0
        %516 = vmatpush2.msra.mxu0 0.0
        %517 = vmatprep.subr.mxu0 0.0
        %518 = vmatpush2.msra.mxu0 0.0
        %519 = vmatprep.subr.mxu0 0.0
        %520 = vmatpush2.msra.mxu0 0.0
        %521 = vmatprep.subr.mxu0 0.0
        %522 = vmatpush2.msra.mxu0 0.0
        %523 = vmatprep.subr.mxu0 0.0
        %524 = vmatpush2.msra.mxu0 0.0
        %525 = vmatprep.subr.mxu0 0.0
        %526 = vmatpush2.msra.mxu0 0.0
        %527 = vmatprep.subr.mxu0 0.0
        %528 = vmatpush2.msra.mxu0 0.0
        %529 = vmatprep.mubr.f32.mxu0 0.0
        %530 = vmatmul.mubr.f32.gmra.mxu0 %v463
        %v531 = vpop.f32.mrf.mxu0
        %v532 = vadd.f32 %v459, %v531
        %v533 = vpop.f32.mrf.mxu0
        %v534 = vadd.f32 %v459, %v533
        %535 = vdwg.mxu0
        %v536 = vmax.f32 %v532, 0.0
        %v537 = vmax.f32 %v534, 0.0
        %v538 = vld [vmem:[%s3] sm:$0xff]
        %v539 = vld [vmem:[%s3 + $0x8] sm:$0xff]
        %v540 = vld [vmem:[%s3 + $0x10] sm:$0xff]
        %v541 = vld [vmem:[%s3 + $0x18] sm:$0xff]
        %v542 = vld [vmem:[%s3 + $0x20] sm:$0xff]
        %v543 = vld [vmem:[%s3 + $0x28] sm:$0xff]
        %v544 = vld [vmem:[%s4] sm:$0xff]
        %v545 = vld [vmem:[%s4 + $0x8] sm:$0xff]
        %v546 = vld [vmem:[%s4 + $0x10] sm:$0xff]
        %v547 = vld [vmem:[%s4 + $0x18] sm:$0xff]
        %v548 = vld [vmem:[%s4 + $0x20] sm:$0xff]
        %v549 = vld [vmem:[%s4 + $0x28] sm:$0xff]
        %551 = vset.pattern.permute.xlu0 0
        %552 = vperm.xlu0 %551, %v544
        %v553 = vpop.permute.xlu0 %552
        %556 = vset.pattern.permute.xlu0 0
        %557 = vperm.xlu0 %556, %v545
        %v558 = vpop.permute.xlu0 %557
        %561 = vset.pattern.permute.xlu0 0
        %562 = vperm.xlu0 %561, %v546
        %v563 = vpop.permute.xlu0 %562
        %566 = vset.pattern.permute.xlu0 0
        %567 = vperm.xlu0 %566, %v547
        %v568 = vpop.permute.xlu0 %567
        %571 = vset.pattern.permute.xlu0 0
        %572 = vperm.xlu0 %571, %v548
        %v573 = vpop.permute.xlu0 %572
        %576 = vset.pattern.permute.xlu0 0
        %577 = vperm.xlu0 %576, %v549
        %v578 = vpop.permute.xlu0 %577
        %vm580 = vcmask 64512
        %v582 = vsel %vm580, %v538, 0
        %v585 = vsel %vm580, %v539, 0
        %v588 = vsel %vm580, %v540, 0
        %v591 = vsel %vm580, %v541, 0
        %v594 = vsel %vm580, %v542, 0
        %v597 = vsel %vm580, %v543, 0
        %599 = vmatprep.subr.mxu0 0.0
        %600 = vmatpush1.msra.mxu0 0.0
        %601 = vmatprep.subr.mxu0 0.0
        %602 = vmatpush1.msra.mxu0 0.0
        %603 = vmatprep.subr.mxu0 0.0
        %604 = vmatpush1.msra.mxu0 0.0
        %605 = vmatprep.subr.mxu0 0.0
        %606 = vmatpush1.msra.mxu0 0.0
        %607 = vmatprep.subr.mxu0 0.0
        %608 = vmatpush1.msra.mxu0 0.0
        %609 = vmatprep.subr.mxu0 0.0
        %610 = vmatpush1.msra.mxu0 0.0
        %611 = vmatprep.subr.mxu0 0.0
        %612 = vmatpush1.msra.mxu0 0.0
        %613 = vmatprep.subr.mxu0 0.0
        %614 = vmatpush1.msra.mxu0 0.0
        %615 = vmatprep.subr.mxu0 0.0
        %616 = vmatpush1.msra.mxu0 0.0
        %617 = vmatprep.subr.mxu0 0.0
        %618 = vmatpush1.msra.mxu0 0.0
        %619 = vmatprep.subr.mxu0 0.0
        %620 = vmatpush1.msra.mxu0 0.0
        %621 = vmatprep.subr.mxu0 0.0
        %622 = vmatpush1.msra.mxu0 0.0
        %623 = vmatprep.subr.mxu0 0.0
        %624 = vmatpush1.msra.mxu0 0.0
        %625 = vmatprep.subr.mxu0 0.0
        %626 = vmatpush1.msra.mxu0 0.0
        %627 = vmatprep.subr.mxu0 0.0
        %628 = vmatpush1.msra.mxu0 0.0
        %629 = vmatprep.subr.mxu0 %v537
        %630 = vmatpush1.msra.mxu0 %v536
        %631 = vmatprep.subr.mxu0 0.0
        %632 = vmatpush2.msra.mxu0 0.0
        %633 = vmatprep.subr.mxu0 0.0
        %634 = vmatpush2.msra.mxu0 0.0
        %635 = vmatprep.subr.mxu0 0.0
        %636 = vmatpush2.msra.mxu0 0.0
        %637 = vmatprep.subr.mxu0 0.0
        %638 = vmatpush2.msra.mxu0 0.0
        %639 = vmatprep.subr.mxu0 0.0
        %640 = vmatpush2.msra.mxu0 0.0
        %641 = vmatprep.subr.mxu0 0.0
        %642 = vmatpush2.msra.mxu0 0.0
        %643 = vmatprep.subr.mxu0 0.0
        %644 = vmatpush2.msra.mxu0 0.0
        %645 = vmatprep.subr.mxu0 0.0
        %646 = vmatpush2.msra.mxu0 0.0
        %647 = vmatprep.subr.mxu0 0.0
        %648 = vmatpush2.msra.mxu0 0.0
        %649 = vmatprep.subr.mxu0 0.0
        %650 = vmatpush2.msra.mxu0 0.0
        %651 = vmatprep.subr.mxu0 0.0
        %652 = vmatpush2.msra.mxu0 0.0
        %653 = vmatprep.subr.mxu0 0.0
        %654 = vmatpush2.msra.mxu0 0.0
        %655 = vmatprep.subr.mxu0 0.0
        %656 = vmatpush2.msra.mxu0 0.0
        %657 = vmatprep.subr.mxu0 0.0
        %658 = vmatpush2.msra.mxu0 0.0
        %659 = vmatprep.subr.mxu0 0.0
        %660 = vmatpush2.msra.mxu0 0.0
        %661 = vmatprep.subr.mxu0 0.0
        %662 = vmatpush2.msra.mxu0 0.0
        %663 = vmatprep.mubr.f32.mxu0 0.0
        %664 = vmatmul.mubr.f32.gmra.mxu0 %v582
        %v665 = vpop.f32.mrf.mxu0
        %v666 = vadd.f32 %v553, %v665
        %v667 = vpop.f32.mrf.mxu0
        %v668 = vadd.f32 %v553, %v667
        %669 = vmatprep.mubr.f32.mxu0 0.0
        %670 = vmatmul.mubr.f32.gmra.mxu0 %v585
        %v671 = vpop.f32.mrf.mxu0
        %v672 = vadd.f32 %v558, %v671
        %v673 = vpop.f32.mrf.mxu0
        %v674 = vadd.f32 %v558, %v673
        %675 = vmatprep.mubr.f32.mxu0 0.0
        %676 = vmatmul.mubr.f32.gmra.mxu0 %v588
        %v677 = vpop.f32.mrf.mxu0
        %v678 = vadd.f32 %v563, %v677
        %v679 = vpop.f32.mrf.mxu0
        %v680 = vadd.f32 %v563, %v679
        %681 = vmatprep.mubr.f32.mxu0 0.0
        %682 = vmatmul.mubr.f32.gmra.mxu0 %v591
        %v683 = vpop.f32.mrf.mxu0
        %v684 = vadd.f32 %v568, %v683
        %v685 = vpop.f32.mrf.mxu0
        %v686 = vadd.f32 %v568, %v685
        %687 = vmatprep.mubr.f32.mxu0 0.0
        %688 = vmatmul.mubr.f32.gmra.mxu0 %v594
        %v689 = vpop.f32.mrf.mxu0
        %v690 = vadd.f32 %v573, %v689
        %v691 = vpop.f32.mrf.mxu0
        %v692 = vadd.f32 %v573, %v691
        %693 = vmatprep.mubr.f32.mxu0 0.0
        %694 = vmatmul.mubr.f32.gmra.mxu0 %v597
        %v695 = vpop.f32.mrf.mxu0
        %v696 = vadd.f32 %v578, %v695
        %v697 = vpop.f32.mrf.mxu0
        %v698 = vadd.f32 %v578, %v697
        %699 = vdwg.mxu0
        %v700 = vmax.f32 %v666, 0.0
        %v701 = vmax.f32 %v668, 0.0
        %vm702 = vcmp.ne.f32.partialorder %v666, %v666
        %vm703 = vcmp.ne.f32.partialorder %v668, %v668
        %v704 = vadd.f32 %v666, 0.0
        %v705 = vadd.f32 %v668, 0.0
        %v706 = vand.u32 2147483647, %v666
        %v707 = vand.u32 2147483647, %v668
        %v708 = vsub.f32 0.0, %v706
        %v709 = vsub.f32 0.0, %v707
        %v710 = vmul.f32 %v708, 1.442695
        %v711 = vpow.pop %v710
        %v712 = vmul.f32 %v709, 1.442695
        %v713 = vpow.pop %v712
        %v714 = vadd.f32 %v711, 1.0
        %v715 = vlog2.pop %v714
        %v716 = vmul.f32 %v715, 0.6931472
        %v717 = vmul.f32 -0.5, %v711
        %v718 = vadd.f32 %v717, 1.0
        %v719 = vmul.f32 %v718, %v711
        %v720 = vand.u32 2147483647, %v711
        %vm721 = vcmp.lt.f32.partialorder %v720, 0.0004427343
        %v722 = vsel %vm721, %v719, %v716
        %v723 = vadd.f32 %v713, 1.0
        %v724 = vlog2.pop %v723
        %v725 = vmul.f32 %v724, 0.6931472
        %v726 = vmul.f32 -0.5, %v713
        %v727 = vadd.f32 %v726, 1.0
        %v728 = vmul.f32 %v727, %v713
        %v729 = vand.u32 2147483647, %v713
        %vm730 = vcmp.lt.f32.partialorder %v729, 0.0004427343
        %v731 = vsel %vm730, %v728, %v725
        %v732 = vadd.f32 %v700, %v722
        %v733 = vadd.f32 %v701, %v731
        %v734 = vsel %vm702, %v704, %v732
        %v735 = vsel %vm703, %v705, %v733
        %v736 = vadd.f32 %v450, %v452
        %v737 = vrot.slane %v736, 4
        %v738 = vadd.f32 %v736, %v737
        %v739 = vrot.slane %v738, 2
        %v740 = vadd.f32 %v738, %v739
        %v741 = vrot.slane %v740, 1
        %v742 = vadd.f32 %v740, %v741
        %v743 = vadd.f32 %v451, %v453
        %v744 = vrot.slane %v743, 4
        %v745 = vadd.f32 %v743, %v744
        %v746 = vrot.slane %v745, 2
        %v747 = vadd.f32 %v745, %v746
        %v748 = vrot.slane %v747, 1
        %v749 = vadd.f32 %v747, %v748
        %v750 = vrcp.pop 16.0
        %v751 = vmul.f32 %v742, %v750
        %v752 = vmul.f32 %v749, %v750
        %v753 = vld [vmem:[%s5] sm:$0xff]
        %v754 = vld [vmem:[%s5 + $0x8] sm:$0xff]
        %v755 = vld [vmem:[%s6] sm:$0xff]
        %v756 = vld [vmem:[%s6 + $0x8] sm:$0xff]
        %758 = vset.pattern.permute.xlu0 0
        %759 = vperm.xlu0 %758, %v755
        %v760 = vpop.permute.xlu0 %759
        %763 = vset.pattern.permute.xlu0 0
        %764 = vperm.xlu0 %763, %v756
        %v765 = vpop.permute.xlu0 %764
        %v768 = vsel %vm580, %v753, 0
        %v771 = vsel %vm580, %v754, 0
        %773 = vmatprep.subr.mxu0 0.0
        %774 = vmatpush1.msra.mxu0 0.0
        %775 = vmatprep.subr.mxu0 0.0
        %776 = vmatpush1.msra.mxu0 0.0
        %777 = vmatprep.subr.mxu0 0.0
        %778 = vmatpush1.msra.mxu0 0.0
        %779 = vmatprep.subr.mxu0 0.0
        %780 = vmatpush1.msra.mxu0 0.0
        %781 = vmatprep.subr.mxu0 0.0
        %782 = vmatpush1.msra.mxu0 0.0
        %783 = vmatprep.subr.mxu0 0.0
        %784 = vmatpush1.msra.mxu0 0.0
        %785 = vmatprep.subr.mxu0 0.0
        %786 = vmatpush1.msra.mxu0 0.0
        %787 = vmatprep.subr.mxu0 0.0
        %788 = vmatpush1.msra.mxu0 0.0
        %789 = vmatprep.subr.mxu0 0.0
        %790 = vmatpush1.msra.mxu0 0.0
        %791 = vmatprep.subr.mxu0 0.0
        %792 = vmatpush1.msra.mxu0 0.0
        %793 = vmatprep.subr.mxu0 0.0
        %794 = vmatpush1.msra.mxu0 0.0
        %795 = vmatprep.subr.mxu0 0.0
        %796 = vmatpush1.msra.mxu0 0.0
        %797 = vmatprep.subr.mxu0 0.0
        %798 = vmatpush1.msra.mxu0 0.0
        %799 = vmatprep.subr.mxu0 0.0
        %800 = vmatpush1.msra.mxu0 0.0
        %801 = vmatprep.subr.mxu0 0.0
        %802 = vmatpush1.msra.mxu0 0.0
        %803 = vmatprep.subr.mxu0 %v537
        %804 = vmatpush1.msra.mxu0 %v536
        %805 = vmatprep.subr.mxu0 0.0
        %806 = vmatpush2.msra.mxu0 0.0
        %807 = vmatprep.subr.mxu0 0.0
        %808 = vmatpush2.msra.mxu0 0.0
        %809 = vmatprep.subr.mxu0 0.0
        %810 = vmatpush2.msra.mxu0 0.0
        %811 = vmatprep.subr.mxu0 0.0
        %812 = vmatpush2.msra.mxu0 0.0
        %813 = vmatprep.subr.mxu0 0.0
        %814 = vmatpush2.msra.mxu0 0.0
        %815 = vmatprep.subr.mxu0 0.0
        %816 = vmatpush2.msra.mxu0 0.0
        %817 = vmatprep.subr.mxu0 0.0
        %818 = vmatpush2.msra.mxu0 0.0
        %819 = vmatprep.subr.mxu0 0.0
        %820 = vmatpush2.msra.mxu0 0.0
        %821 = vmatprep.subr.mxu0 0.0
        %822 = vmatpush2.msra.mxu0 0.0
        %823 = vmatprep.subr.mxu0 0.0
        %824 = vmatpush2.msra.mxu0 0.0
        %825 = vmatprep.subr.mxu0 0.0
        %826 = vmatpush2.msra.mxu0 0.0
        %827 = vmatprep.subr.mxu0 0.0
        %828 = vmatpush2.msra.mxu0 0.0
        %829 = vmatprep.subr.mxu0 0.0
        %830 = vmatpush2.msra.mxu0 0.0
        %831 = vmatprep.subr.mxu0 0.0
        %832 = vmatpush2.msra.mxu0 0.0
        %833 = vmatprep.subr.mxu0 0.0
        %834 = vmatpush2.msra.mxu0 0.0
        %835 = vmatprep.subr.mxu0 0.0
        %836 = vmatpush2.msra.mxu0 0.0
        %837 = vmatprep.mubr.f32.mxu0 0.0
        %838 = vmatmul.mubr.f32.gmra.mxu0 %v768
        %v839 = vpop.f32.mrf.mxu0
        %v840 = vadd.f32 %v760, %v839
        %v841 = vpop.f32.mrf.mxu0
        %v842 = vadd.f32 %v760, %v841
        %843 = vmatprep.mubr.f32.mxu0 0.0
        %844 = vmatmul.mubr.f32.gmra.mxu0 %v771
        %v845 = vpop.f32.mrf.mxu0
        %v846 = vadd.f32 %v765, %v845
        %v847 = vpop.f32.mrf.mxu0
        %v848 = vadd.f32 %v765, %v847
        %849 = vdwg.mxu0
        %v850 = vld [vmem:[%s442] sm:$0xff]
        %v851 = vld [vmem:[%s442 + $0x8] sm:$0xff]
        %v852 = vlaneseq
        %v853 = vshrl.u32 %v852, 7
        %v854 = vsub.s32 0, %v853
        %v855 = vrot.slane %v734, %v854
        %v856 = vlaneseq
        %v857 = vshrl.u32 %v856, 7
        %v858 = vsub.s32 0, %v857
        %v859 = vrot.slane %v735, %v858
        %861 = vset.pattern.permute.xlu0 0
        %862 = vperm.xlu0 %861, %v850
        %v863 = vpop.permute.xlu0 %862
        %866 = vset.pattern.permute.xlu0 0
        %867 = vperm.xlu0 %866, %v851
        %v868 = vpop.permute.xlu0 %867
        %v870 = vmul.f32 %v855, %v863
        %v871 = vmul.f32 %v859, %v863
        %v872 = vmul.f32 %v855, %v868
        %v873 = vmul.f32 %v859, %v868
        %v874 = vadd.f32 %v840, %v870
        %v875 = vadd.f32 %v842, %v871
        %v876 = vadd.f32 %v846, %v872
        %v877 = vadd.f32 %v848, %v873
        %v878 = vld [vmem:[%s447] sm:$0xff]
        %v879 = vld [vmem:[%s447 + $0x8] sm:$0xff]
        %v880 = vlaneseq
        %v881 = vshrl.u32 %v880, 7
        %v882 = vsub.s32 1, %v881
        %v883 = vrot.slane %v734, %v882
        %v884 = vlaneseq
        %v885 = vshrl.u32 %v884, 7
        %v886 = vsub.s32 1, %v885
        %v887 = vrot.slane %v735, %v886
        %889 = vset.pattern.permute.xlu0 0
        %890 = vperm.xlu0 %889, %v878
        %v891 = vpop.permute.xlu0 %890
        %894 = vset.pattern.permute.xlu0 0
        %895 = vperm.xlu0 %894, %v879
        %v896 = vpop.permute.xlu0 %895
        %v898 = vmul.f32 %v883, %v891
        %v899 = vmul.f32 %v887, %v891
        %v900 = vmul.f32 %v883, %v896
        %v901 = vmul.f32 %v887, %v896
        %v902 = vadd.f32 %v874, %v898
        %v903 = vadd.f32 %v875, %v899
        %v904 = vadd.f32 %v876, %v900
        %v905 = vadd.f32 %v877, %v901
        %v906 = vmul.f32 %v751, %v902
        %v907 = vmul.f32 %v752, %v903
        %v908 = vmul.f32 %v751, %v904
        %v909 = vmul.f32 %v752, %v905
        %910 = vst [vmem:[%s430] sm:$0xff] %v906
        %911 = vst [vmem:[%s430 + $0x8] sm:$0xff] %v907
        %912 = vst [vmem:[%s430 + $0x10] sm:$0xff] %v908
        %913 = vst [vmem:[%s430 + $0x18] sm:$0xff] %v909
        %914 = vst [vmem:[%s436] sm:$0xff] %v666
        %915 = vst [vmem:[%s436 + $0x8] sm:$0xff] %v668
        %916 = vst [vmem:[%s436 + $0x10] sm:$0xff] %v672
        %917 = vst [vmem:[%s436 + $0x18] sm:$0xff] %v674
        %918 = vst [vmem:[%s436 + $0x20] sm:$0xff] %v678
        %919 = vst [vmem:[%s436 + $0x28] sm:$0xff] %v680
        %920 = vst [vmem:[%s436 + $0x30] sm:$0xff] %v684
        %921 = vst [vmem:[%s436 + $0x38] sm:$0xff] %v686
        %922 = vst [vmem:[%s436 + $0x40] sm:$0xff] %v690
        %923 = vst [vmem:[%s436 + $0x48] sm:$0xff] %v692
        %924 = vst [vmem:[%s436 + $0x50] sm:$0xff] %v696
        %925 = vst [vmem:[%s436 + $0x58] sm:$0xff] %v698
        %926 = vst [vmem:[%s436] sm:$0x3] %v734
        %927 = vst [vmem:[%s436 + $0x8] sm:$0x3] %v735
        %s928 = sand.u32 %s250, 1
        %s929 = sand.u32 %s250, 1
        %s930 = smul.addr %s929, 32
        %s931 = scalar_lea.vmem [#allocation3], %s930
        %s932 = sand.u32 %s278, 1
        %s933 = sand.u32 %s278, 1
        %s934 = smul.addr %s933, 96
        %s935 = scalar_lea.vmem [#allocation4], %s934
        // Predicated region
        $region80: #{model_forward.1} parent=74 // pred_check
          %p936 = pneg %p260
        $region81: #{model_forward.1} parent=74 // pred_check_branch
          %938 = sbr.rel (%p936) target = $region83
        $region82: #{model_forward.1} parent=74 // pred_region
          %s939 = smul.u32 2, %s27
          %s940 = smul.addr %s26, 12
          %s941 = sadd.s32 %s939, %s940
          %s942 = smul.addr %s941, 8
          %s943 = scalar_lea.vmem %s9, %s942
          // Predicated region
          $region84: #{model_forward.1} parent=82 // pred_check
            _
          $region85: #{model_forward.1} parent=82 // pred_check_branch
            %945 = sbr.rel (0) target = $region87
          $region86: #{model_forward.1} parent=82 // pred_region
            // Predicated region
            $region88: #{model_forward.1} parent=86 // pred_check
              _
            $region89: #{model_forward.1} parent=86 // pred_check_branch
              %947 = sbr.rel (0) target = $region91
            $region90: #{model_forward.1} parent=86 // pred_region
              loop: start=0, step=1, limit=1
              $region92: #{model_forward.1} parent=90 // loop_pre_header
                _
              $region93: #{model_forward.1} parent=90 // loop_header
                %s949 = sphi 0, %s953
                %p950 = scmp.ge.s32.totalorder %s949, 1
                %s954 = sphi %s931, %s931
                %s955 = sphi %s943, %s943
              $region94: #{model_forward.1} parent=90 // loop_header_branch
                %952 = sbr.rel (%p950) target = $region98
              $region95: #{model_forward.1} parent=90 // loop_body
                %v956 = vld [vmem:[%s954] sm:$0xff]
                %957 = vst [vmem:[%s955] sm:$0xff] %v956
                %v958 = vld [vmem:[%s954 + $0x8] sm:$0xff]
                %959 = vst [vmem:[%s955 + $0x8] sm:$0xff] %v958
                %v960 = vld [vmem:[%s954 + $0x10] sm:$0xff]
                %961 = vst [vmem:[%s955 + $0x30] sm:$0xff] %v960
                %v962 = vld [vmem:[%s954 + $0x18] sm:$0xff]
                %963 = vst [vmem:[%s955 + $0x38] sm:$0xff] %v962
              $region96: #{model_forward.1} parent=90 // loop_footer
                %s953 = sadd.s32 1, %s949
              $region97: #{model_forward.1} parent=90 // loop_footer_branch
                %948 = sbr.rel target = $region93
              $region98: #{model_forward.1} parent=90 // loop_exit
                _
            $region91: #{model_forward.1} parent=86 // pred_fallthru
              _
            // Predicated region
            $region99: #{model_forward.1} parent=86 // pred_check
              _
            $region100: #{model_forward.1} parent=86 // pred_check_branch
              %965 = sbr.rel target = $region102
            $region101: #{model_forward.1} parent=86 // pred_region
              _
            $region102: #{model_forward.1} parent=86 // pred_fallthru
              _
          $region87: #{model_forward.1} parent=82 // pred_fallthru
            _
          %966 = vnop
        $region83: #{model_forward.1} parent=74 // pred_fallthru
          _
        // Predicated region
        $region103: #{model_forward.1} parent=74 // pred_check
          %p967 = pneg %p288
        $region104: #{model_forward.1} parent=74 // pred_check_branch
          %969 = sbr.rel (%p967) target = $region106
        $region105: #{model_forward.1} parent=74 // pred_region
          %s970 = smul.u32 2, %s27
          %s971 = smul.addr %s26, 36
          %s972 = sadd.s32 %s970, %s971
          %s973 = smul.addr %s972, 8
          %s974 = scalar_lea.vmem %s10, %s973
          // Predicated region
          $region107: #{model_forward.1} parent=105 // pred_check
            _
          $region108: #{model_forward.1} parent=105 // pred_check_branch
            %976 = sbr.rel (0) target = $region110
          $region109: #{model_forward.1} parent=105 // pred_region
            // Predicated region
            $region111: #{model_forward.1} parent=109 // pred_check
              _
            $region112: #{model_forward.1} parent=109 // pred_check_branch
              %978 = sbr.rel (0) target = $region114
            $region113: #{model_forward.1} parent=109 // pred_region
              loop: start=0, step=1, limit=1
              $region115: #{model_forward.1} parent=113 // loop_pre_header
                _
              $region116: #{model_forward.1} parent=113 // loop_header
                %s980 = sphi 0, %s984
                %p981 = scmp.ge.s32.totalorder %s980, 1
                %s985 = sphi %s935, %s935
                %s986 = sphi %s974, %s974
              $region117: #{model_forward.1} parent=113 // loop_header_branch
                %983 = sbr.rel (%p981) target = $region121
              $region118: #{model_forward.1} parent=113 // loop_body
                %v987 = vld [vmem:[%s985] sm:$0xff]
                %988 = vst [vmem:[%s986] sm:$0xff] %v987
                %v989 = vld [vmem:[%s985 + $0x8] sm:$0xff]
                %990 = vst [vmem:[%s986 + $0x8] sm:$0xff] %v989
                %v991 = vld [vmem:[%s985 + $0x10] sm:$0xff]
                %992 = vst [vmem:[%s986 + $0x30] sm:$0xff] %v991
                %v993 = vld [vmem:[%s985 + $0x18] sm:$0xff]
                %994 = vst [vmem:[%s986 + $0x38] sm:$0xff] %v993
                %v995 = vld [vmem:[%s985 + $0x20] sm:$0xff]
                %996 = vst [vmem:[%s986 + $0x60] sm:$0xff] %v995
                %v997 = vld [vmem:[%s985 + $0x28] sm:$0xff]
                %998 = vst [vmem:[%s986 + $0x68] sm:$0xff] %v997
                %v999 = vld [vmem:[%s985 + $0x30] sm:$0xff]
                %1000 = vst [vmem:[%s986 + $0x90] sm:$0xff] %v999
                %v1001 = vld [vmem:[%s985 + $0x38] sm:$0xff]
                %1002 = vst [vmem:[%s986 + $0x98] sm:$0xff] %v1001
                %v1003 = vld [vmem:[%s985 + $0x40] sm:$0xff]
                %1004 = vst [vmem:[%s986 + $0xc0] sm:$0xff] %v1003
                %v1005 = vld [vmem:[%s985 + $0x48] sm:$0xff]
                %1006 = vst [vmem:[%s986 + $0xc8] sm:$0xff] %v1005
                %v1007 = vld [vmem:[%s985 + $0x50] sm:$0xff]
                %1008 = vst [vmem:[%s986 + $0xf0] sm:$0xff] %v1007
                %v1009 = vld [vmem:[%s985 + $0x58] sm:$0xff]
                %1010 = vst [vmem:[%s986 + $0xf8] sm:$0xff] %v1009
              $region119: #{model_forward.1} parent=113 // loop_footer
                %s984 = sadd.s32 1, %s980
              $region120: #{model_forward.1} parent=113 // loop_footer_branch
                %979 = sbr.rel target = $region116
              $region121: #{model_forward.1} parent=113 // loop_exit
                _
            $region114: #{model_forward.1} parent=109 // pred_fallthru
              _
            // Predicated region
            $region122: #{model_forward.1} parent=109 // pred_check
              _
            $region123: #{model_forward.1} parent=109 // pred_check_branch
              %1012 = sbr.rel target = $region125
            $region124: #{model_forward.1} parent=109 // pred_region
              _
            $region125: #{model_forward.1} parent=109 // pred_fallthru
              _
          $region110: #{model_forward.1} parent=105 // pred_fallthru
            _
          %1013 = vnop
        $region106: #{model_forward.1} parent=74 // pred_fallthru
          _
      $region75: #{model_forward.1} parent=5 // pred_fallthru
        _
      %p1014 = scmp.le.s32.totalorder 2, %s17
      // Predicated region
      $region126: #{model_forward.1} parent=5 // pred_check
        %p1015 = pneg %p1014
      $region127: #{model_forward.1} parent=5 // pred_check_branch
        %1017 = sbr.rel (%p1015) target = $region129
      $region128: #{model_forward.1} parent=5 // pred_region
        %s1018 = ssub.s32 %s17, 2
        // Predicated region
        $region130: #{model_forward.1} parent=128 // pred_check
          %p1019 = pneg %p266
        $region131: #{model_forward.1} parent=128 // pred_check_branch
          %1021 = sbr.rel (%p1019) target = $region133
        $region132: #{model_forward.1} parent=128 // pred_region
          %s1022 = sand.u32 %s251, 1
          %s1023 = sand.u32 %s251, 1
          %s1024 = smul.addr %s1023, 32
          %s1025 = scalar_lea.vmem [#allocation3], %s1024
        $region133: #{model_forward.1} parent=128 // pred_fallthru
          _
        // Predicated region
        $region134: #{model_forward.1} parent=128 // pred_check
          %p1026 = pneg %p294
        $region135: #{model_forward.1} parent=128 // pred_check_branch
          %1028 = sbr.rel (%p1026) target = $region137
        $region136: #{model_forward.1} parent=128 // pred_region
          %s1029 = sand.u32 %s279, 1
          %s1030 = sand.u32 %s279, 1
          %s1031 = smul.addr %s1030, 96
          %s1032 = scalar_lea.vmem [#allocation4], %s1031
        $region137: #{model_forward.1} parent=128 // pred_fallthru
          _
      $region129: #{model_forward.1} parent=5 // pred_fallthru
        _
    $region6: #{model_forward.1} parent=1 // loop_footer
      %s21 = sadd.s32 1, %s17
    $region7: #{model_forward.1} parent=1 // loop_footer_branch
      %16 = sbr.rel target = $region3
    $region8: #{model_forward.1} parent=1 // loop_exit
      _

</llo_original>
